<compile_context>
chip_gen: v6e
topology: v6e:2x2x1
jax: 0.10.0
libtpu: 0.0.40
codegen_flags: <defaults>
</compile_context>

<pallas_src>
import math

import numpy as np
import jax
import jax.numpy as jnp
from jax import lax
from jax.experimental import pallas as pl
from jax.experimental.pallas import tpu as pltpu

GROUPS = 32
EPS = 1e-5


# --------------------------------------------------------------------------
# in-kernel helpers
# --------------------------------------------------------------------------

def _silu(h):
    """SiLU in f32; the sigmoid's 1/x goes to the EUP slot (approx reciprocal)."""
    return h * pl.reciprocal(1.0 + jnp.exp(-h), approx=True)


def _fill_padded(hp_ref, hc, hu, hd, T, W, c):
    """Fill the (T+2, W+2, c) bf16 zero-halo buffer.

    Only the two 1-pixel border columns are zero-filled each step; top/bottom
    halo rows carry (masked) neighbour-row data and the interior is overwritten.
    """
    zcol = jnp.zeros((T + 2, 1, c), jnp.bfloat16)
    hp_ref[:, 0:1, :] = zcol
    hp_ref[:, W + 1:W + 2, :] = zcol
    hp_ref[0:1, 1:W + 1, :] = hu.astype(jnp.bfloat16)
    hp_ref[1:T + 1, 1:W + 1, :] = hc.astype(jnp.bfloat16)
    hp_ref[T + 1:T + 2, 1:W + 1, :] = hd.astype(jnp.bfloat16)


def _im2col(hp_ref, T, W, c):
    """Build the (T*W, 9*c) bf16 im2col operand for one fused 3x3-conv matmul."""
    taps = []
    for ky in range(3):
        for kx in range(3):
            taps.append(hp_ref[ky:ky + T, kx:kx + W, :].reshape(T * W, c))
    return jnp.concatenate(taps, axis=1)


# --------------------------------------------------------------------------
# pass 1: GroupNorm statistics (per-channel sum / sum-of-squares over tiles)
# --------------------------------------------------------------------------

def _stats_kernel(x_ref, sums_ref):
    t = pl.program_id(1)

    @pl.when(t == 0)
    def _():
        sums_ref[...] = jnp.zeros_like(sums_ref)

    c = x_ref.shape[-1]
    x = x_ref[...].astype(jnp.float32).reshape(-1, c)
    s = jnp.sum(x, axis=0, keepdims=True)
    ss = jnp.sum(x * x, axis=0, keepdims=True)
    sums_ref[...] += jnp.concatenate([s, ss], axis=0)[None]


# --------------------------------------------------------------------------
# pass 2: GN1 + SiLU -> conv1 (fused im2col matmul) + GN2 statistics
# --------------------------------------------------------------------------

def _make_conv1_kernel(T, W, cin, cout):
    def kernel(xc_ref, xu_ref, xd_ref, sc_ref, sh_ref, w_ref, b_ref,
               y_ref, sums_ref, hp_ref):
        t = pl.program_id(1)
        nt = pl.num_programs(1)
        scale = sc_ref[...]                               # (1, 1, Cin) f32
        shift = sh_ref[...]

        def norm_act(v):                                  # GroupNorm affine + SiLU, f32
            h = v * scale + shift
            return _silu(h)

        up_ok = (t > 0).astype(jnp.float32)               # halo rows outside image -> 0
        dn_ok = (t < nt - 1).astype(jnp.float32)
        hc = norm_act(xc_ref[0].astype(jnp.float32))              # (T, W, Cin)
        hu = norm_act(xu_ref[0].astype(jnp.float32)) * up_ok      # (1, W, Cin)
        hd = norm_act(xd_ref[0].astype(jnp.float32)) * dn_ok

        _fill_padded(hp_ref, hc, hu, hd, T, W, cin)
        patch = _im2col(hp_ref, T, W, cin)                # (T*W, 9*Cin) bf16
        y = jnp.dot(patch, w_ref[...],
                    preferred_element_type=jnp.float32) + b_ref[...]

        y_ref[...] = y.reshape(1, T, W, cout).astype(y_ref.dtype)

        @pl.when(t == 0)
        def _():
            sums_ref[...] = jnp.zeros_like(sums_ref)

        s = jnp.sum(y, axis=0, keepdims=True)
        ss = jnp.sum(y * y, axis=0, keepdims=True)
        sums_ref[...] += jnp.concatenate([s, ss], axis=0)[None]

    return kernel


# --------------------------------------------------------------------------
# pass 3: GN2 + SiLU -> conv2 (fused im2col matmul) + residual add
# --------------------------------------------------------------------------

def _make_conv2_kernel(T, W, cin, cout, has_proj):
    def kernel(*refs):
        if has_proj:
            (yc_ref, yu_ref, yd_ref, sc_ref, sh_ref, w_ref, b_ref,
             xr_ref, wr_ref, br_ref, o_ref, hp_ref) = refs
        else:
            (yc_ref, yu_ref, yd_ref, sc_ref, sh_ref, w_ref, b_ref,
             xr_ref, o_ref, hp_ref) = refs

        t = pl.program_id(1)
        nt = pl.num_programs(1)
        scale = sc_ref[...]
        shift = sh_ref[...]

        def norm_act(v):
            h = v * scale + shift
            return _silu(h)

        up_ok = (t > 0).astype(jnp.float32)
        dn_ok = (t < nt - 1).astype(jnp.float32)
        hc = norm_act(yc_ref[0].astype(jnp.float32))
        hu = norm_act(yu_ref[0].astype(jnp.float32)) * up_ok
        hd = norm_act(yd_ref[0].astype(jnp.float32)) * dn_ok

        _fill_padded(hp_ref, hc, hu, hd, T, W, cout)
        patch = _im2col(hp_ref, T, W, cout)
        y2 = jnp.dot(patch, w_ref[...],
                     preferred_element_type=jnp.float32) + b_ref[...]

        xr = xr_ref[0].astype(jnp.float32).reshape(T * W, cin)
        if has_proj:
            res = jnp.dot(xr.astype(jnp.bfloat16), wr_ref[...],
                          preferred_element_type=jnp.float32) + br_ref[...]
        else:
            res = xr                                       # Cin == Cout

        o_ref[...] = (y2 + res).reshape(1, T, W, cout).astype(o_ref.dtype)

    return kernel


# --------------------------------------------------------------------------
# wrapper-side helpers
# --------------------------------------------------------------------------

def _vmem_budget_bytes():
    cap = 64 * 1024 * 1024
    try:
        cap = int(getattr(pltpu.get_tpu_info(), "vmem_capacity_bytes", cap))
    except Exception:
        pass
    return (cap * 3) // 4            # ~48 MiB on v7x (64 MiB/TC), ~96 MiB on v5e/v6e


def _pick_row_tile(H, W, cin, cout, budget):
    cmax = max(cin, cout)

    def need(T):
        x_in = 2 * (T + 2) * W * cin * 4                   # double-buffered x tile + halos
        y_io = 2 * (T + 2) * W * cout * 4 + 2 * T * W * cout * 4
        wts = 2 * 9 * cmax * cout * 2                      # double-buffered bf16 tap weights
        scr = (T + 2) * (W + 2) * cmax * 2 + T * W * 9 * cmax * 2
        return x_in + y_io + wts + scr

    best = 1
    for T in sorted(d for d in range(1, H + 1) if H % d == 0):
        if need(T) <= budget:
            best = T
    return best


def _scale_shift(sums, gamma, beta, hw):
    """Finalize GroupNorm stats -> per-channel (scale, shift), each (N, 1, C) f32."""
    n, _, c = sums.shape
    cpg = c // GROUPS
    cnt = float(hw * cpg)
    mean = sums[:, 0, :].reshape(n, GROUPS, cpg).sum(axis=-1) / cnt
    ex2 = sums[:, 1, :].reshape(n, GROUPS, cpg).sum(axis=-1) / cnt
    var = jnp.maximum(ex2 - mean * mean, 0.0)
    rstd = lax.rsqrt(var + EPS)
    mean_c = jnp.repeat(mean, cpg, axis=1)                 # (N, C)
    rstd_c = jnp.repeat(rstd, cpg, axis=1)
    scale = (rstd_c * gamma[None, :]).astype(jnp.float32)
    shift = (beta[None, :] - mean_c * scale).astype(jnp.float32)
    return scale.reshape(n, 1, c), shift.reshape(n, 1, c)


def vae_residual_block(x_nchw, params, row_tile=None):
    """x_nchw: (N, Cin, H, W).  Returns (N, Cout, H, W)."""
    n, cin, H, W = x_nchw.shape
    cout = params["conv1_w"].shape[0]
    assert cin % GROUPS == 0 and cout % GROUPS == 0
    has_proj = cin != cout
    hw = H * W

    vmem_limit = _vmem_budget_bytes()
    T = row_tile if row_tile is not None else _pick_row_tile(H, W, cin, cout, vmem_limit)
    assert H % T == 0
    nT = H // T

    # NCHW -> NHWC (channels on the lane axis, image rows tiled on the grid).
    x = jnp.transpose(x_nchw, (0, 2, 3, 1))

    # weights prepped once at the boundary: tap-major (9*Cin, Cout) bf16
    w1 = jnp.transpose(params["conv1_w"], (2, 3, 1, 0)).reshape(9 * cin, cout).astype(jnp.bfloat16)
    w2 = jnp.transpose(params["conv2_w"], (2, 3, 1, 0)).reshape(9 * cout, cout).astype(jnp.bfloat16)
    b1 = params["conv1_b"].reshape(1, cout).astype(jnp.float32)
    b2 = params["conv2_b"].reshape(1, cout).astype(jnp.float32)

    cen_map = lambda i, t: (i, t, 0, 0)
    up_map = lambda i, t: (i, jnp.maximum(t * T - 1, 0), 0, 0)      # block size 1 => row index
    dn_map = lambda i, t: (i, jnp.minimum(t * T + T, H - 1), 0, 0)
    img_map = lambda i, t: (i, 0, 0)
    full2 = lambda i, t: (0, 0)

    cp_acc = pltpu.CompilerParams(dimension_semantics=("parallel", "arbitrary"),
                                  vmem_limit_bytes=vmem_limit)
    cp_par = pltpu.CompilerParams(dimension_semantics=("parallel", "parallel"),
                                  vmem_limit_bytes=vmem_limit)

    # ---- pass 1: GroupNorm1 statistics over the full image ----
    sums1 = pl.pallas_call(
        _stats_kernel,
        out_shape=jax.ShapeDtypeStruct((n, 2, cin), jnp.float32),
        grid_spec=pltpu.PrefetchScalarGridSpec(
            num_scalar_prefetch=0,
            grid=(n, nT),
            in_specs=[pl.BlockSpec((1, T, W, cin), cen_map)],
            out_specs=pl.BlockSpec((1, 2, cin), lambda i, t: (i, 0, 0))),
        compiler_params=cp_acc,
    )(x)
    s1, t1 = _scale_shift(sums1, params["gn1_w"], params["gn1_b"], hw)

    # ---- pass 2: GN1 + SiLU -> conv1 (one fused matmul) + GN2 statistics ----
    y1, sums2 = pl.pallas_call(
        _make_conv1_kernel(T, W, cin, cout),
        out_shape=(jax.ShapeDtypeStruct((n, H, W, cout), jnp.float32),
                   jax.ShapeDtypeStruct((n, 2, cout), jnp.float32)),
        grid_spec=pltpu.PrefetchScalarGridSpec(
            num_scalar_prefetch=0,
            grid=(n, nT),
            in_specs=[pl.BlockSpec((1, T, W, cin), cen_map),
                      pl.BlockSpec((1, 1, W, cin), up_map),
                      pl.BlockSpec((1, 1, W, cin), dn_map),
                      pl.BlockSpec((1, 1, cin), img_map),
                      pl.BlockSpec((1, 1, cin), img_map),
                      pl.BlockSpec((9 * cin, cout), full2),
                      pl.BlockSpec((1, cout), full2)],
            out_specs=(pl.BlockSpec((1, T, W, cout), cen_map),
                       pl.BlockSpec((1, 2, cout), lambda i, t: (i, 0, 0))),
            scratch_shapes=[pltpu.VMEM((T + 2, W + 2, cin), jnp.bfloat16)]),
        compiler_params=cp_acc,
    )(x, x, x, s1, t1, w1, b1)
    s2, t2 = _scale_shift(sums2, params["gn2_w"], params["gn2_b"], hw)

    # ---- pass 3: GN2 + SiLU -> conv2 (one fused matmul) + residual ----
    inputs = [y1, y1, y1, s2, t2, w2, b2, x]
    in_specs = [pl.BlockSpec((1, T, W, cout), cen_map),
                pl.BlockSpec((1, 1, W, cout), up_map),
                pl.BlockSpec((1, 1, W, cout), dn_map),
                pl.BlockSpec((1, 1, cout), img_map),
                pl.BlockSpec((1, 1, cout), img_map),
                pl.BlockSpec((9 * cout, cout), full2),
                pl.BlockSpec((1, cout), full2),
                pl.BlockSpec((1, T, W, cin), cen_map)]
    if has_proj:
        wr = params["res_w"].reshape(cout, cin).T.astype(jnp.bfloat16)
        br = params["res_b"].reshape(1, cout).astype(jnp.float32)
        inputs += [wr, br]
        in_specs += [pl.BlockSpec((cin, cout), full2), pl.BlockSpec((1, cout), full2)]

    out = pl.pallas_call(
        _make_conv2_kernel(T, W, cin, cout, has_proj),
        out_shape=jax.ShapeDtypeStruct((n, H, W, cout), x_nchw.dtype),
        grid_spec=pltpu.PrefetchScalarGridSpec(
            num_scalar_prefetch=0,
            grid=(n, nT),
            in_specs=in_specs,
            out_specs=pl.BlockSpec((1, T, W, cout), cen_map),
            scratch_shapes=[pltpu.VMEM((T + 2, W + 2, cout), jnp.bfloat16)]),
        compiler_params=cp_par,
    )(*inputs)

    return jnp.transpose(out, (0, 3, 1, 2))                # NHWC -> NCHW


# ----------------------------- reference + test -----------------------------

def _reference(x, p):
    def gn(z, w, b):
        n, c, hh, ww = z.shape
        zr = z.reshape(n, GROUPS, c // GROUPS, hh, ww)
        mean = zr.mean(axis=(2, 3, 4), keepdims=True)
        var = ((zr - mean) ** 2).mean(axis=(2, 3, 4), keepdims=True)
        zn = (zr - mean) / jnp.sqrt(var + EPS)
        return zn.reshape(n, c, hh, ww) * w[None, :, None, None] + b[None, :, None, None]

    def silu(z):
        return z * jax.nn.sigmoid(z)

    def conv3(z, w, b):
        y = lax.conv_general_dilated(z, w, (1, 1), "SAME",
                                     dimension_numbers=("NCHW", "OIHW", "NCHW"))
        return y + b[None, :, None, None]

    h = conv3(silu(gn(x, p["gn1_w"], p["gn1_b"])), p["conv1_w"], p["conv1_b"])
    h = conv3(silu(gn(h, p["gn2_w"], p["gn2_b"])), p["conv2_w"], p["conv2_b"])
    if "res_w" in p:
        cout, cin = p["res_w"].shape[:2]
        res = jnp.einsum("nchw,oc->nohw", x, p["res_w"].reshape(cout, cin)) \
              + p["res_b"][None, :, None, None]
    else:
        res = x
    return h + res


def _init_params(key, cin, cout):
    ks = jax.random.split(key, 10)
    p = {
        "gn1_w": 1.0 + 0.1 * jax.random.normal(ks[0], (cin,), jnp.float32),
        "gn1_b": 0.1 * jax.random.normal(ks[1], (cin,), jnp.float32),
        "conv1_w": jax.random.normal(ks[2], (cout, cin, 3, 3), jnp.float32) / math.sqrt(9 * cin),
        "conv1_b": 0.05 * jax.random.normal(ks[3], (cout,), jnp.float32),
        "gn2_w": 1.0 + 0.1 * jax.random.normal(ks[4], (cout,), jnp.float32),
        "gn2_b": 0.1 * jax.random.normal(ks[5], (cout,), jnp.float32),
        "conv2_w": jax.random.normal(ks[6], (cout, cout, 3, 3), jnp.float32) / math.sqrt(9 * cout),
        "conv2_b": 0.05 * jax.random.normal(ks[7], (cout,), jnp.float32),
    }
    if cin != cout:
        p["res_w"] = jax.random.normal(ks[8], (cout, cin, 1, 1), jnp.float32) / math.sqrt(cin)
        p["res_b"] = 0.05 * jax.random.normal(ks[9], (cout,), jnp.float32)
    return p


if __name__ == "__main__":
    key = jax.random.PRNGKey(0)
    k_x1, k_p1, k_x2, k_p2 = jax.random.split(key, 4)

    # Config A: Cin != Cout (1x1-conv residual), forced 2 row-tiles -> exercises halos.
    N, CIN, COUT, H, W = 2, 64, 128, 16, 16
    x1 = jax.random.normal(k_x1, (N, CIN, H, W), jnp.float32)
    p1 = _init_params(k_p1, CIN, COUT)
    out1 = jax.block_until_ready(vae_residual_block(x1, p1, row_tile=8))
    ref1 = jax.block_until_ready(_reference(x1, p1))
    np.testing.assert_allclose(np.asarray(out1), np.asarray(ref1), rtol=4e-2, atol=4e-2)

    # Config B: Cin == Cout (Identity residual), automatic tile selection.
    x2 = jax.random.normal(k_x2, (N, 64, H, W), jnp.float32)
    p2 = _init_params(k_p2, 64, 64)
    out2 = jax.block_until_ready(vae_residual_block(x2, p2))
    ref2 = jax.block_until_ready(_reference(x2, p2))
    np.testing.assert_allclose(np.asarray(out2), np.asarray(ref2), rtol=4e-2, atol=4e-2)

    print("KERNEL_OK")
</pallas_src>

<mosaic_0001>
module attributes {stable_mosaic.version = 11 : i64} {
  func.func @_stats_kernel(%arg0: i32, %arg1: i32, %arg2: memref<1x8x16x64xf32, #tpu.memory_space<vmem>>, %arg3: memref<1x2x64xf32, #tpu.memory_space<vmem>>) attributes {dimension_semantics = [#tpu.dimension_semantics<parallel>, #tpu.dimension_semantics<arbitrary>], iteration_bounds = array<i64: 2, 2>, scalar_prefetch = 0 : i64, scratch_operands = 0 : i64, tpu.core_type = #tpu.core_type<tc>, window_params = [{transform_indices = @transform_0, window_bounds = array<i64: 1, 8, 16, 64>}, {transform_indices = @transform_1, window_bounds = array<i64: 1, 2, 64>}]} {
    %c0_i32 = arith.constant 0 : i32
    %0 = arith.cmpi eq, %arg1, %c0_i32 : i32
    %1 = arith.extui %0 : i1 to i32
    %c0_i32_0 = arith.constant 0 : i32
    %2 = arith.cmpi ne, %1, %c0_i32_0 : i32
    scf.if %2 {
      %cst_11 = arith.constant 0.000000e+00 : f32
      %15 = vector.broadcast %cst_11 : f32 to vector<1x2x64xf32>
      %c0_12 = arith.constant 0 : index
      %c0_13 = arith.constant 0 : index
      %c0_14 = arith.constant 0 : index
      %16 = vector.load %arg3[%c0_12, %c0_13, %c0_14] : memref<1x2x64xf32, #tpu.memory_space<vmem>>, vector<1x2x64xf32>
      tpu.vector_store %arg3[%c0_12, %c0_13, %c0_14], %15 {strides = array<i32>} : memref<1x2x64xf32, #tpu.memory_space<vmem>>, vector<1x2x64xf32>,
    } else {
    }
    %c0 = arith.constant 0 : index
    %c0_1 = arith.constant 0 : index
    %c0_2 = arith.constant 0 : index
    %c0_3 = arith.constant 0 : index
    %3 = vector.load %arg2[%c0, %c0_1, %c0_2, %c0_3] : memref<1x8x16x64xf32, #tpu.memory_space<vmem>>, vector<1x8x16x64xf32>
    %4 = vector.shape_cast %3 : vector<1x8x16x64xf32> to vector<128x64xf32>
    %cst = arith.constant dense<0.000000e+00> : vector<64xf32>
    %5 = vector.multi_reduction <add>, %4, %cst [0] : vector<128x64xf32> to vector<64xf32>
    %6 = vector.shape_cast %5 : vector<64xf32> to vector<1x64xf32>
    %7 = arith.mulf %4, %4 : vector<128x64xf32>
    %cst_4 = arith.constant dense<0.000000e+00> : vector<64xf32>
    %8 = vector.multi_reduction <add>, %7, %cst_4 [0] : vector<128x64xf32> to vector<64xf32>
    %9 = vector.shape_cast %8 : vector<64xf32> to vector<1x64xf32>
    %c0_5 = arith.constant 0 : index
    %c0_6 = arith.constant 0 : index
    %c0_7 = arith.constant 0 : index
    %10 = vector.load %arg3[%c0_5, %c0_6, %c0_7] : memref<1x2x64xf32, #tpu.memory_space<vmem>>, vector<1x2x64xf32>
    %11 = tpu.concatenate %6, %9 in 0 : vector<1x64xf32>, vector<1x64xf32> -> vector<2x64xf32>
    %12 = vector.shape_cast %11 : vector<2x64xf32> to vector<1x2x64xf32>
    %13 = arith.addf %10, %12 : vector<1x2x64xf32>
    %c0_8 = arith.constant 0 : index
    %c0_9 = arith.constant 0 : index
    %c0_10 = arith.constant 0 : index
    %14 = vector.load %arg3[%c0_8, %c0_9, %c0_10] : memref<1x2x64xf32, #tpu.memory_space<vmem>>, vector<1x2x64xf32>
    tpu.vector_store %arg3[%c0_8, %c0_9, %c0_10], %13 {strides = array<i32>} : memref<1x2x64xf32, #tpu.memory_space<vmem>>, vector<1x2x64xf32>,
    return
  }
  func.func @transform_0(%arg0: i32, %arg1: i32) -> (i32, i32, i32, i32) {
    %c0_i32 = arith.constant 0 : i32
    %c0_i32_0 = arith.constant 0 : i32
    %c0_i32_1 = arith.constant 0 : i32
    return %arg0, %arg1, %c0_i32, %c0_i32_0 : i32, i32, i32, i32
  }
  func.func @transform_1(%arg0: i32, %arg1: i32) -> (i32, i32, i32) {
    %c0_i32 = arith.constant 0 : i32
    %c0_i32_0 = arith.constant 0 : i32
    %c0_i32_1 = arith.constant 0 : i32
    return %arg0, %c0_i32, %c0_i32_0 : i32, i32, i32
  }
}

</mosaic_0001>

<llo_original>
// kernel: tpu_custom_call.1
$region0: #{tpu_custom_call.1}
  #allocation0 [shape = 'u32[]', space=smem, size = 0x4, offset = 0x4, fixed_abs, tag = 'smem constant byte address 0x4 - core index']
  #allocation1 [shape = 'u32[144,128]{1,0:T(1,128)}', space=vmem, size = 0x12000, scoped, tag = 'internal scratch']
  %s0 = inlined_call_operand.hbm [shape: f32[2,16,16,64], index: 0, kind: input, shape index: {}]
  %s1 = inlined_call_operand.hbm [shape: f32[2,2,64], index: 1, kind: output, shape index: {}]
  %s2 = sld [smem:[#allocation0]]
  $region45: #{tpu_custom_call.1} parent=0
    _
  %s4 = ssub.s32 1, %s2
  %s5 = scalar_select 0, %s4, %s2
  $region1: #{tpu_custom_call.1} parent=0
    #allocation2 [shape = 'u8[131072]{0}', space=vmem, size = 0x20000, scoped, tag = 'input window, operand 0']
    #allocation3 [shape = 's32[2]{0}', space=sflag, size = 0x8, scoped, tag = 'scoped memory for tpu_custom_call.1']
    #allocation4 [shape = 's32[2]{0}', space=sflag, size = 0x8, scoped, tag = 'scoped memory for tpu_custom_call.1']
    #allocation5 [shape = 'u8[2048]{0}', space=vmem, size = 0x800, scoped, tag = 'output window, operand 0']
    %6 = vsyncpa [#allocation3], 0
    %s7 = scalar_lea.sflag [#allocation3], 1
    %8 = vsyncpa %s7, 0
    %9 = vsyncpa [#allocation4], 0
    %s10 = scalar_lea.sflag [#allocation4], 1
    %11 = vsyncpa %s10, 0
    loop: start=0, step=1, limit=6
    $region2: #{tpu_custom_call.1} parent=1 // loop_pre_header
      _
    $region3: #{tpu_custom_call.1} parent=1 // loop_header
      %s13 = sphi 0, %s17
      %p14 = scmp.ge.s32.totalorder %s13, 6
      %s20 = sphi 0, %s32
      %s21 = sphi 0, %s28
      %s22 = sphi 0, %s20
      %s23 = sphi 0, %s21
      %s24 = sphi 0, %s22
      %s25 = sphi 0, %s23
      %s37 = sphi 0, %s39
      %s40 = sphi 0, %s37
      %s41 = sphi 0, %s40
      %s57 = sphi 0, %s41
      %s63 = sphi 0, %s65
      %s66 = sphi 0, %s63
      %s67 = sphi 0, %s66
      %s83 = sphi 0, %s67
    $region4: #{tpu_custom_call.1} parent=1 // loop_header_branch
      %16 = sbr.rel (%p14) target = $region8
    $region5: #{tpu_custom_call.1} parent=1 // loop_body
      %s18 = ssub.s32 %s13, 1
      %s19 = ssub.s32 %s13, 2
      %s26 = sadd.s32 1, %s21
      %p27 = scmp.ge.s32.totalorder %s26, 2
      %s28 = scalar_select %p27, 0, %s26
      %s29 = sadd.s32 1, %s20
      %s30 = scalar_select %p27, %s29, %s20
      %p31 = scmp.ge.s32.totalorder %s30, 2
      %s32 = scalar_select %p31, 0, %s30
      %s33 = ssub.s32 %s20, %s32
      %s34 = ssub.s32 %s21, %s28
      %s35 = sor.u32 %s33, %s34
      %p36 = scmp.eq.s32.totalorder %s35, 0
      %s38 = sadd.s32 %s37, 1
      %s39 = scalar_select %p36, %s37, %s38
      %p42 = pneg %p36
      %p43 = scmp.eq.s32.totalorder %s13, 3
      %p44 = por %p42, %p43
      %p45 = scmp.ne.s32.totalorder %s37, %s40
      %p46 = scmp.eq.s32.totalorder %s13, 0
      %p47 = por %p45, %p46
      %p48 = scmp.ne.s32.totalorder %s37, %s40
      %p49 = scmp.eq.s32.totalorder %s18, 3
      %p50 = por %p48, %p49
      %p51 = scmp.ne.s32.totalorder %s40, %s41
      %p52 = scmp.eq.s32.totalorder %s18, 0
      %p53 = por %p51, %p52
      %p54 = scmp.ne.s32.totalorder %s40, %s41
      %p55 = scmp.eq.s32.totalorder %s19, 3
      %p56 = por %p54, %p55
      %p58 = scmp.ne.s32.totalorder %s41, %s57
      %p59 = scmp.eq.s32.totalorder %s19, 0
      %p60 = por %p58, %p59
      %s61 = ssub.s32 %s20, %s32
      %p62 = scmp.eq.s32.totalorder %s61, 0
      %s64 = sadd.s32 %s63, 1
      %s65 = scalar_select %p62, %s63, %s64
      %p68 = pneg %p62
      %p69 = scmp.eq.s32.totalorder %s13, 3
      %p70 = por %p68, %p69
      %p71 = scmp.ne.s32.totalorder %s63, %s66
      %p72 = scmp.eq.s32.totalorder %s13, 0
      %p73 = por %p71, %p72
      %p74 = scmp.ne.s32.totalorder %s63, %s66
      %p75 = scmp.eq.s32.totalorder %s18, 3
      %p76 = por %p74, %p75
      %p77 = scmp.ne.s32.totalorder %s66, %s67
      %p78 = scmp.eq.s32.totalorder %s18, 0
      %p79 = por %p77, %p78
      %p80 = scmp.ne.s32.totalorder %s66, %s67
      %p81 = scmp.eq.s32.totalorder %s19, 3
      %p82 = por %p80, %p81
      %p84 = scmp.ne.s32.totalorder %s67, %s83
      %p85 = scmp.eq.s32.totalorder %s19, 0
      %p86 = por %p84, %p85
      %p87 = scmp.le.s32.totalorder 1, %s13
      %p88 = scmp.lt.s32.totalorder %s13, 5
      %p89 = pnand %p87, %p88
      %p90 = pneg %p89
      // Predicated region
      $region9: #{tpu_custom_call.1} parent=5 // pred_check
        _
      $region10: #{tpu_custom_call.1} parent=5 // pred_check_branch
        %92 = sbr.rel (%p89) target = $region12
      $region11: #{tpu_custom_call.1} parent=5 // pred_region
        %s93 = ssub.s32 %s13, 1
      $region12: #{tpu_custom_call.1} parent=5 // pred_fallthru
        _
      %p94 = scmp.lt.s32.totalorder %s13, 4
      // Predicated region
      $region13: #{tpu_custom_call.1} parent=5 // pred_check
        %p95 = pneg %p94
      $region14: #{tpu_custom_call.1} parent=5 // pred_check_branch
        %97 = sbr.rel (%p95) target = $region16
      $region15: #{tpu_custom_call.1} parent=5 // pred_region
        // Predicated region
        $region17: #{tpu_custom_call.1} parent=15 // pred_check
          %p98 = pneg %p47
        $region18: #{tpu_custom_call.1} parent=15 // pred_check_branch
          %100 = sbr.rel (%p98) target = $region20
        $region19: #{tpu_custom_call.1} parent=15 // pred_region
          %s101 = sand.u32 %s37, 1
          %s102 = scalar_lea.sflag [#allocation3], %s101
          %s103 = sand.u32 %s37, 1
          %s104 = smul.addr %s103, 128
          %s105 = scalar_lea.vmem [#allocation2], %s104
          %s106 = smul.u32 8, %s21
          %s108 = ssub.s32 2048, 2048
          %109 = vsyncadd %s102, %s108
          %s110 = smul.addr %s106, 2
          %s111 = smul.addr %s20, 32
          %s112 = sadd.s32 %s110, %s111
          %s113 = smul.addr %s112, 128
          %s114 = scalar_lea.hbm %s0, %s113
          %s115 = sshll.u32 %s105, 4
          %s116 = int_to_ptr.vmem [resolvable:$true] %s115
          %121 = dma.hbm_to_vmem [thread:$0]  %s114, 2048, %s116, %s102, 128, 128, 8
        $region20: #{tpu_custom_call.1} parent=15 // pred_fallthru
          _
      $region16: #{tpu_custom_call.1} parent=5 // pred_fallthru
        _
      %p122 = scmp.le.s32.totalorder 1, %s13
      %p123 = scmp.lt.s32.totalorder %s13, 5
      %p124 = pnand %p122, %p123
      %p125 = pneg %p124
      // Predicated region
      $region21: #{tpu_custom_call.1} parent=5 // pred_check
        _
      $region22: #{tpu_custom_call.1} parent=5 // pred_check_branch
        %127 = sbr.rel (%p124) target = $region24
      $region23: #{tpu_custom_call.1} parent=5 // pred_region
        %s128 = ssub.s32 %s13, 1
        %s129 = sand.u32 %s40, 1
        %s130 = scalar_lea.sflag [#allocation3], %s129
        %s131 = sand.u32 %s40, 1
        %s132 = smul.addr %s131, 128
        %s133 = scalar_lea.vmem [#allocation2], %s132
        // Predicated region
        $region25: #{tpu_custom_call.1} parent=23 // pred_check
          %p134 = pneg %p53
        $region26: #{tpu_custom_call.1} parent=23 // pred_check_branch
          %136 = sbr.rel (%p134) target = $region28
        $region27: #{tpu_custom_call.1} parent=23 // pred_region
          %137 = dma.done %s130, 2048
        $region28: #{tpu_custom_call.1} parent=23 // pred_fallthru
          _
        %s138 = sand.u32 %s40, 1
        %s139 = scalar_lea.sflag [#allocation3], %s138
        %s140 = sand.u32 %s40, 1
        %s141 = smul.addr %s140, 128
        %s142 = scalar_lea.vmem [#allocation2], %s141
        %p143 = pneg %p53
        %p144 = pneg %p50
        %p145 = pneg %p79
        %p146 = pneg %p76
        %s147 = sand.u32 %s66, 1
        %s148 = scalar_lea.sflag [#allocation4], %s147
        %s149 = sand.u32 %s66, 1
        %s150 = smul.addr %s149, 2
        %s151 = scalar_lea.vmem [#allocation5], %s150
        %s152 = smul.u32 8, %s23
        %p153 = scmp.eq.s32.totalorder %s23, 0
        // Predicated region
        $region29: #{tpu_custom_call.1} parent=23 // pred_check
          %p154 = pneg %p153
        $region30: #{tpu_custom_call.1} parent=23 // pred_check_branch
          %156 = sbr.rel (%p154) target = $region32
        $region31: #{tpu_custom_call.1} parent=23 // pred_region
          %vm157 = vcmask 517120
          %158 = vst.msk [vmem:[%s151] sm:$0x3] %vm157, 0.0
        $region32: #{tpu_custom_call.1} parent=23 // pred_fallthru
          _
        %v159 = vld [vmem:[%s133] sm:$0xff]
        %v160 = vld [vmem:[%s133 + $0x8] sm:$0xff]
        %v161 = vld [vmem:[%s133 + $0x10] sm:$0xff]
        %v162 = vld [vmem:[%s133 + $0x18] sm:$0xff]
        %v163 = vld [vmem:[%s133 + $0x20] sm:$0xff]
        %v164 = vld [vmem:[%s133 + $0x28] sm:$0xff]
        %v165 = vld [vmem:[%s133 + $0x30] sm:$0xff]
        %v166 = vld [vmem:[%s133 + $0x38] sm:$0xff]
        %v167 = vld [vmem:[%s133 + $0x40] sm:$0xff]
        %v168 = vld [vmem:[%s133 + $0x48] sm:$0xff]
        %v169 = vld [vmem:[%s133 + $0x50] sm:$0xff]
        %v170 = vld [vmem:[%s133 + $0x58] sm:$0xff]
        %v171 = vld [vmem:[%s133 + $0x60] sm:$0xff]
        %v172 = vld [vmem:[%s133 + $0x68] sm:$0xff]
        %v173 = vld [vmem:[%s133 + $0x70] sm:$0xff]
        %v174 = vld [vmem:[%s133 + $0x78] sm:$0xff]
        %vm175 = vcmask 523264
        %v176 = vsel %vm175, %v159, 0.0
        %v177 = vsel %vm175, %v160, 0.0
        %v178 = vadd.f32 %v176, %v177
        %v179 = vsel %vm175, %v161, 0.0
        %v180 = vadd.f32 %v178, %v179
        %v181 = vsel %vm175, %v162, 0.0
        %v182 = vadd.f32 %v180, %v181
        %v183 = vsel %vm175, %v163, 0.0
        %v184 = vadd.f32 %v182, %v183
        %v185 = vsel %vm175, %v164, 0.0
        %v186 = vadd.f32 %v184, %v185
        %v187 = vsel %vm175, %v165, 0.0
        %v188 = vadd.f32 %v186, %v187
        %v189 = vsel %vm175, %v166, 0.0
        %v190 = vadd.f32 %v188, %v189
        %v191 = vsel %vm175, %v167, 0.0
        %v192 = vadd.f32 %v190, %v191
        %v193 = vsel %vm175, %v168, 0.0
        %v194 = vadd.f32 %v192, %v193
        %v195 = vsel %vm175, %v169, 0.0
        %v196 = vadd.f32 %v194, %v195
        %v197 = vsel %vm175, %v170, 0.0
        %v198 = vadd.f32 %v196, %v197
        %v199 = vsel %vm175, %v171, 0.0
        %v200 = vadd.f32 %v198, %v199
        %v201 = vsel %vm175, %v172, 0.0
        %v202 = vadd.f32 %v200, %v201
        %v203 = vsel %vm175, %v173, 0.0
        %v204 = vadd.f32 %v202, %v203
        %v205 = vsel %vm175, %v174, 0.0
        %v206 = vadd.f32 %v204, %v205
        %v207 = vrot.slane %v206, 4
        %v208 = vadd.f32 %v206, %v207
        %v209 = vrot.slane %v208, 2
        %v210 = vadd.f32 %v208, %v209
        %v211 = vrot.slane %v210, 1
        %v212 = vadd.f32 %v210, %v211
        %v213 = vmul.f32 %v159, %v159
        %v214 = vmul.f32 %v160, %v160
        %v215 = vmul.f32 %v161, %v161
        %v216 = vmul.f32 %v162, %v162
        %v217 = vmul.f32 %v163, %v163
        %v218 = vmul.f32 %v164, %v164
        %v219 = vmul.f32 %v165, %v165
        %v220 = vmul.f32 %v166, %v166
        %v221 = vmul.f32 %v167, %v167
        %v222 = vmul.f32 %v168, %v168
        %v223 = vmul.f32 %v169, %v169
        %v224 = vmul.f32 %v170, %v170
        %v225 = vmul.f32 %v171, %v171
        %v226 = vmul.f32 %v172, %v172
        %v227 = vmul.f32 %v173, %v173
        %v228 = vmul.f32 %v174, %v174
        %v229 = vsel %vm175, %v213, 0.0
        %v230 = vsel %vm175, %v214, 0.0
        %v231 = vadd.f32 %v229, %v230
        %v232 = vsel %vm175, %v215, 0.0
        %v233 = vadd.f32 %v231, %v232
        %v234 = vsel %vm175, %v216, 0.0
        %v235 = vadd.f32 %v233, %v234
        %v236 = vsel %vm175, %v217, 0.0
        %v237 = vadd.f32 %v235, %v236
        %v238 = vsel %vm175, %v218, 0.0
        %v239 = vadd.f32 %v237, %v238
        %v240 = vsel %vm175, %v219, 0.0
        %v241 = vadd.f32 %v239, %v240
        %v242 = vsel %vm175, %v220, 0.0
        %v243 = vadd.f32 %v241, %v242
        %v244 = vsel %vm175, %v221, 0.0
        %v245 = vadd.f32 %v243, %v244
        %v246 = vsel %vm175, %v222, 0.0
        %v247 = vadd.f32 %v245, %v246
        %v248 = vsel %vm175, %v223, 0.0
        %v249 = vadd.f32 %v247, %v248
        %v250 = vsel %vm175, %v224, 0.0
        %v251 = vadd.f32 %v249, %v250
        %v252 = vsel %vm175, %v225, 0.0
        %v253 = vadd.f32 %v251, %v252
        %v254 = vsel %vm175, %v226, 0.0
        %v255 = vadd.f32 %v253, %v254
        %v256 = vsel %vm175, %v227, 0.0
        %v257 = vadd.f32 %v255, %v256
        %v258 = vsel %vm175, %v228, 0.0
        %v259 = vadd.f32 %v257, %v258
        %v260 = vrot.slane %v259, 4
        %v261 = vadd.f32 %v259, %v260
        %v262 = vrot.slane %v261, 2
        %v263 = vadd.f32 %v261, %v262
        %v264 = vrot.slane %v263, 1
        %v265 = vadd.f32 %v263, %v264
        %v266 = vld [vmem:[%s151] sm:$0x3]
        %vm267 = vcmask 1040384
        %v268 = vsel %vm267, %v212, %v265
        %v269 = vadd.f32 %v266, %v268
        %vm270 = vcmask 517120
        %271 = vst.msk [vmem:[%s151] sm:$0x3] %vm270, %v269
        %s272 = sand.u32 %s66, 1
        %s273 = scalar_lea.sflag [#allocation4], %s272
        %s274 = sand.u32 %s66, 1
        %s275 = smul.addr %s274, 2
        %s276 = scalar_lea.vmem [#allocation5], %s275
        // Predicated region
        $region33: #{tpu_custom_call.1} parent=23 // pred_check
          %p277 = pneg %p76
        $region34: #{tpu_custom_call.1} parent=23 // pred_check_branch
          %279 = sbr.rel (%p277) target = $region36
        $region35: #{tpu_custom_call.1} parent=23 // pred_region
          %s281 = ssub.s32 32, 32
          %282 = vsyncadd %s273, %s281
          %s283 = smul.addr %s22, 32
          %s284 = scalar_lea.hbm %s1, %s283
          %s286 = sshll.u32 %s276, 4
          %s287 = int_to_ptr.vmem [resolvable:$true] %s286
          %289 = dma.vmem_to_hbm [thread:$0]  %s287, 32, %s284, %s273
        $region36: #{tpu_custom_call.1} parent=23 // pred_fallthru
          _
      $region24: #{tpu_custom_call.1} parent=5 // pred_fallthru
        _
      %p290 = scmp.le.s32.totalorder 2, %s13
      // Predicated region
      $region37: #{tpu_custom_call.1} parent=5 // pred_check
        %p291 = pneg %p290
      $region38: #{tpu_custom_call.1} parent=5 // pred_check_branch
        %293 = sbr.rel (%p291) target = $region40
      $region39: #{tpu_custom_call.1} parent=5 // pred_region
        %s294 = ssub.s32 %s13, 2
        // Predicated region
        $region41: #{tpu_custom_call.1} parent=39 // pred_check
          %p295 = pneg %p82
        $region42: #{tpu_custom_call.1} parent=39 // pred_check_branch
          %297 = sbr.rel (%p295) target = $region44
        $region43: #{tpu_custom_call.1} parent=39 // pred_region
          %s298 = sand.u32 %s67, 1
          %s299 = scalar_lea.sflag [#allocation4], %s298
          %s300 = sand.u32 %s67, 1
          %s301 = smul.addr %s300, 2
          %s302 = scalar_lea.vmem [#allocation5], %s301
          %303 = dma.done %s299, 32
        $region44: #{tpu_custom_call.1} parent=39 // pred_fallthru
          _
      $region40: #{tpu_custom_call.1} parent=5 // pred_fallthru
        _
    $region6: #{tpu_custom_call.1} parent=1 // loop_footer
      %s17 = sadd.s32 1, %s13
    $region7: #{tpu_custom_call.1} parent=1 // loop_footer_branch
      %12 = sbr.rel target = $region3
    $region8: #{tpu_custom_call.1} parent=1 // loop_exit
      _
    %304 = vsyncpa [#allocation3], 1
    %s305 = scalar_lea.sflag [#allocation3], 1
    %306 = vsyncpa %s305, 1
    %307 = vsyncpa [#allocation4], 1
    %s308 = scalar_lea.sflag [#allocation4], 1
    %309 = vsyncpa %s308, 1

</llo_original>
